<compile_context>
chip_gen: v7x
topology: tpu7x:2x2x1
jax: 0.10.0
libtpu: 0.0.40
codegen_flags: <defaults>
</compile_context>

<pallas_src>
import functools
import random

import jax
import jax.numpy as jnp
from jax.experimental import pallas as pl
from jax.experimental.pallas import tpu as pltpu

LANE = 128  # TPU lane width; pad feature dims to this for lane-dense layout.


def _round_up(n: int, m: int) -> int:
    return ((n + m - 1) // m) * m


def make_dynamic_net_kernel(n_mid: int, n_rows: int):
    """Build a kernel specialized on the (static) middle-layer repeat count."""

    def kernel(x_ref,                  # (N, D_in_p)  f32
               w1_ref, b1_ref,         # (D_in_p, H_p) bf16, (1, H_p) f32
               w2_ref, b2_ref,         # (H_p, H_p)    bf16, (1, H_p) f32
               w3_ref, b3_ref,         # (H_p, D_out_p) bf16, (1, D_out_p) f32
               out_ref):               # (N, D_out_p) f32
        # input_linear + clamp(min=0). bf16 operands into the MXU, f32 accumulate.
        h = jnp.dot(x_ref[...].astype(jnp.bfloat16), w1_ref[...],
                    preferred_element_type=jnp.float32)
        h = jnp.maximum(h + b1_ref[...], 0.0)

        # middle_linear applied a static (specialized) number of times, ReLU
        # each time. w2 load and the (1,H)->(N,H) bias broadcast are hoisted
        # out of the unrolled loop.
        if n_mid > 0:
            w2 = w2_ref[...]
            b2b = jnp.broadcast_to(b2_ref[...], (n_rows, b2_ref.shape[1]))
            for _ in range(n_mid):
                h = jnp.dot(h.astype(jnp.bfloat16), w2,
                            preferred_element_type=jnp.float32)
                h = jnp.maximum(h + b2b, 0.0)

        # output_linear (no activation)
        y = jnp.dot(h.astype(jnp.bfloat16), w3_ref[...],
                    preferred_element_type=jnp.float32)
        out_ref[...] = (y + b3_ref[...]).astype(out_ref.dtype)

    return kernel


@functools.lru_cache(maxsize=None)
def _build_forward(n_mid: int, N: int, D_in_p: int, H_p: int, D_out_p: int):
    """One cached pallas_call per (n_mid, padded shapes) combination."""
    kernel = make_dynamic_net_kernel(n_mid, N)

    def full(shape):
        return pl.BlockSpec(shape, lambda i, _s=shape: (0,) * len(_s))

    return pl.pallas_call(
        kernel,
        out_shape=jax.ShapeDtypeStruct((N, D_out_p), jnp.float32),
        grid=(1,),
        in_specs=[
            full((N, D_in_p)),
            full((D_in_p, H_p)), full((1, H_p)),
            full((H_p, H_p)), full((1, H_p)),
            full((H_p, D_out_p)), full((1, D_out_p)),
        ],
        out_specs=full((N, D_out_p)),
        compiler_params=pltpu.CompilerParams(
            dimension_semantics=("arbitrary",)),
        # TODO(synk): if N or H ever grow, tile the grid over N (blocks of 128
        # rows, weights replicated via index_map) and mark that axis "parallel"
        # to engage v7x's second TensorCore and stay inside its 64 MiB VMEM.
    )


def prepare_kernel_params(params):
    """One-time conversion from PyTorch layout ((out,in) weights, (out,) biases)
    to kernel layout: (in,out) bf16 weights and (1,out) f32 biases, all feature
    dims zero-padded to the 128-lane width."""
    H, D_in = params["w1"].shape
    D_out = params["w3"].shape[0]
    D_in_p = _round_up(D_in, LANE)
    H_p = _round_up(H, LANE)
    D_out_p = _round_up(D_out, LANE)

    def pad_w(w, rows, cols):   # w already transposed to (in, out)
        w = jnp.asarray(w, jnp.float32)
        w = jnp.pad(w, ((0, rows - w.shape[0]), (0, cols - w.shape[1])))
        return w.astype(jnp.bfloat16)

    def pad_b(b, cols):
        b = jnp.asarray(b, jnp.float32)
        return jnp.pad(b, (0, cols - b.shape[0])).reshape(1, cols)

    return {
        "w1": pad_w(jnp.asarray(params["w1"]).T, D_in_p, H_p),
        "b1": pad_b(params["b1"], H_p),
        "w2": pad_w(jnp.asarray(params["w2"]).T, H_p, H_p),
        "b2": pad_b(params["b2"], H_p),
        "w3": pad_w(jnp.asarray(params["w3"]).T, H_p, D_out_p),
        "b3": pad_b(params["b3"], D_out_p),
        "dims": (D_in, D_out, D_in_p, H_p, D_out_p),
    }


def dynamic_net_forward(x, kparams, n_mid):
    """x: (N, D_in) f32. kparams: output of prepare_kernel_params.
    n_mid: Python int in [0, 10] (the dynamic repeat count)."""
    D_in, D_out, D_in_p, H_p, D_out_p = kparams["dims"]
    N = x.shape[0]
    x_p = jnp.pad(x.astype(jnp.float32), ((0, 0), (0, D_in_p - D_in)))
    fwd = _build_forward(int(n_mid), N, D_in_p, H_p, D_out_p)
    y_p = fwd(x_p, kparams["w1"], kparams["b1"],
              kparams["w2"], kparams["b2"],
              kparams["w3"], kparams["b3"])
    return y_p[:, :D_out]


def reference_forward(x, params, n_mid):
    """Pure-JAX reference mirroring the kernel numerics (bf16 MXU operands,
    f32 accumulation, f32 bias/ReLU)."""
    def bdot(a, w):
        return jnp.dot(a.astype(jnp.bfloat16), w.astype(jnp.bfloat16),
                       preferred_element_type=jnp.float32)
    h = jnp.maximum(bdot(x, params["w1"].T) + params["b1"], 0.0)
    for _ in range(n_mid):
        h = jnp.maximum(bdot(h, params["w2"].T) + params["b2"], 0.0)
    return bdot(h, params["w3"].T) + params["b3"]


if __name__ == "__main__":
    # Small shapes implied by the module: N x D_in input, hidden H, output D_out.
    N, D_in, H, D_out = 8, 16, 32, 8

    key = jax.random.PRNGKey(0)
    kx, k1, k2, k3, kb1, kb2, kb3 = jax.random.split(key, 7)

    x = jax.random.normal(kx, (N, D_in), dtype=jnp.float32)

    # Deterministic parameter init (PyTorch Linear layout: weight (out, in)).
    params = {
        "w1": jax.random.normal(k1, (H, D_in), dtype=jnp.float32) * 0.1,
        "b1": jax.random.normal(kb1, (H,), dtype=jnp.float32) * 0.1,
        "w2": jax.random.normal(k2, (H, H), dtype=jnp.float32) * 0.1,
        "b2": jax.random.normal(kb2, (H,), dtype=jnp.float32) * 0.1,
        "w3": jax.random.normal(k3, (D_out, H), dtype=jnp.float32) * 0.1,
        "b3": jax.random.normal(kb3, (D_out,), dtype=jnp.float32) * 0.1,
    }

    # One-time layout conversion / padding / bf16 cast.
    kparams = prepare_kernel_params(params)

    # Deterministic stand-in for `random.randint(0, 10)` in forward().
    random.seed(0)
    n_mid = random.randint(0, 10)

    y = dynamic_net_forward(x, kparams, n_mid)
    y = jax.block_until_ready(y)

    y_ref = reference_forward(x, params, n_mid)
    assert y.shape == (N, D_out)
    assert jnp.allclose(y, y_ref, atol=1e-3, rtol=1e-3), "mismatch vs reference"

    # Exercise a couple more repeat counts to confirm specialization is correct.
    for extra in (0, 3):
        y2 = jax.block_until_ready(dynamic_net_forward(x, kparams, extra))
        assert jnp.allclose(y2, reference_forward(x, params, extra),
                            atol=1e-3, rtol=1e-3), f"mismatch at n_mid={extra}"

    print("KERNEL_OK")
</pallas_src>

<mosaic_0001>
module attributes {stable_mosaic.version = 11 : i64} {
  func.func @kernel(%arg0: i32, %arg1: memref<8x128xf32, #tpu.memory_space<vmem>>, %arg2: memref<128x128xbf16, #tpu.memory_space<vmem>>, %arg3: memref<1x128xf32, #tpu.memory_space<vmem>>, %arg4: memref<128x128xbf16, #tpu.memory_space<vmem>>, %arg5: memref<1x128xf32, #tpu.memory_space<vmem>>, %arg6: memref<128x128xbf16, #tpu.memory_space<vmem>>, %arg7: memref<1x128xf32, #tpu.memory_space<vmem>>, %arg8: memref<8x128xf32, #tpu.memory_space<vmem>>) attributes {dimension_semantics = [#tpu.dimension_semantics<arbitrary>], iteration_bounds = array<i64: 1>, scalar_prefetch = 0 : i64, scratch_operands = 0 : i64, tpu.core_type = #tpu.core_type<tc>, window_params = [{pipeline_mode = #tpu.pipeline_mode<synchronous>, transform_indices = @transform_0, window_bounds = array<i64: 8, 128>}, {pipeline_mode = #tpu.pipeline_mode<synchronous>, transform_indices = @transform_1, window_bounds = array<i64: 128, 128>}, {pipeline_mode = #tpu.pipeline_mode<synchronous>, transform_indices = @transform_2, window_bounds = array<i64: 1, 128>}, {pipeline_mode = #tpu.pipeline_mode<synchronous>, transform_indices = @transform_3, window_bounds = array<i64: 128, 128>}, {pipeline_mode = #tpu.pipeline_mode<synchronous>, transform_indices = @transform_4, window_bounds = array<i64: 1, 128>}, {pipeline_mode = #tpu.pipeline_mode<synchronous>, transform_indices = @transform_5, window_bounds = array<i64: 128, 128>}, {pipeline_mode = #tpu.pipeline_mode<synchronous>, transform_indices = @transform_6, window_bounds = array<i64: 1, 128>}, {pipeline_mode = #tpu.pipeline_mode<synchronous>, transform_indices = @transform_7, window_bounds = array<i64: 8, 128>}]} {
    %c0 = arith.constant 0 : index
    %c0_0 = arith.constant 0 : index
    %0 = vector.load %arg1[%c0, %c0_0] : memref<8x128xf32, #tpu.memory_space<vmem>>, vector<8x128xf32>
    %1 = arith.truncf %0 : vector<8x128xf32> to vector<8x128xbf16>
    %c0_1 = arith.constant 0 : index
    %c0_2 = arith.constant 0 : index
    %2 = vector.load %arg2[%c0_1, %c0_2] : memref<128x128xbf16, #tpu.memory_space<vmem>>, vector<128x128xbf16>
    %cst = arith.constant dense<0.000000e+00> : vector<8x128xf32>
    %3 = tpu.matmul %1, %2, %cst {dimension_numbers = #tpu.dot_dimension_numbers<[1], [0], [0], [1], [0, 0, 1, 1], [], []>} : vector<8x128xbf16>, vector<128x128xbf16>, vector<8x128xf32> -> vector<8x128xf32>
    %c0_3 = arith.constant 0 : index
    %c0_4 = arith.constant 0 : index
    %4 = vector.load %arg3[%c0_3, %c0_4] : memref<1x128xf32, #tpu.memory_space<vmem>>, vector<1x128xf32>
    %5 = vector.broadcast %4 : vector<1x128xf32> to vector<8x128xf32>
    %6 = arith.addf %3, %5 : vector<8x128xf32>
    %cst_5 = arith.constant 0.000000e+00 : f32
    %7 = vector.broadcast %cst_5 : f32 to vector<8x128xf32>
    %8 = arith.maximumf %6, %7 : vector<8x128xf32>
    %c0_6 = arith.constant 0 : index
    %c0_7 = arith.constant 0 : index
    %9 = vector.load %arg4[%c0_6, %c0_7] : memref<128x128xbf16, #tpu.memory_space<vmem>>, vector<128x128xbf16>
    %c0_8 = arith.constant 0 : index
    %c0_9 = arith.constant 0 : index
    %10 = vector.load %arg5[%c0_8, %c0_9] : memref<1x128xf32, #tpu.memory_space<vmem>>, vector<1x128xf32>
    %11 = vector.shape_cast %10 : vector<1x128xf32> to vector<1x128xf32>
    %12 = vector.broadcast %11 : vector<1x128xf32> to vector<8x128xf32>
    %13 = arith.truncf %8 : vector<8x128xf32> to vector<8x128xbf16>
    %cst_10 = arith.constant dense<0.000000e+00> : vector<8x128xf32>
    %14 = tpu.matmul %13, %9, %cst_10 {dimension_numbers = #tpu.dot_dimension_numbers<[1], [0], [0], [1], [0, 0, 1, 1], [], []>} : vector<8x128xbf16>, vector<128x128xbf16>, vector<8x128xf32> -> vector<8x128xf32>
    %15 = arith.addf %14, %12 : vector<8x128xf32>
    %cst_11 = arith.constant 0.000000e+00 : f32
    %16 = vector.broadcast %cst_11 : f32 to vector<8x128xf32>
    %17 = arith.maximumf %15, %16 : vector<8x128xf32>
    %18 = arith.truncf %17 : vector<8x128xf32> to vector<8x128xbf16>
    %cst_12 = arith.constant dense<0.000000e+00> : vector<8x128xf32>
    %19 = tpu.matmul %18, %9, %cst_12 {dimension_numbers = #tpu.dot_dimension_numbers<[1], [0], [0], [1], [0, 0, 1, 1], [], []>} : vector<8x128xbf16>, vector<128x128xbf16>, vector<8x128xf32> -> vector<8x128xf32>
    %20 = arith.addf %19, %12 : vector<8x128xf32>
    %cst_13 = arith.constant 0.000000e+00 : f32
    %21 = vector.broadcast %cst_13 : f32 to vector<8x128xf32>
    %22 = arith.maximumf %20, %21 : vector<8x128xf32>
    %23 = arith.truncf %22 : vector<8x128xf32> to vector<8x128xbf16>
    %cst_14 = arith.constant dense<0.000000e+00> : vector<8x128xf32>
    %24 = tpu.matmul %23, %9, %cst_14 {dimension_numbers = #tpu.dot_dimension_numbers<[1], [0], [0], [1], [0, 0, 1, 1], [], []>} : vector<8x128xbf16>, vector<128x128xbf16>, vector<8x128xf32> -> vector<8x128xf32>
    %25 = arith.addf %24, %12 : vector<8x128xf32>
    %cst_15 = arith.constant 0.000000e+00 : f32
    %26 = vector.broadcast %cst_15 : f32 to vector<8x128xf32>
    %27 = arith.maximumf %25, %26 : vector<8x128xf32>
    %28 = arith.truncf %27 : vector<8x128xf32> to vector<8x128xbf16>
    %cst_16 = arith.constant dense<0.000000e+00> : vector<8x128xf32>
    %29 = tpu.matmul %28, %9, %cst_16 {dimension_numbers = #tpu.dot_dimension_numbers<[1], [0], [0], [1], [0, 0, 1, 1], [], []>} : vector<8x128xbf16>, vector<128x128xbf16>, vector<8x128xf32> -> vector<8x128xf32>
    %30 = arith.addf %29, %12 : vector<8x128xf32>
    %cst_17 = arith.constant 0.000000e+00 : f32
    %31 = vector.broadcast %cst_17 : f32 to vector<8x128xf32>
    %32 = arith.maximumf %30, %31 : vector<8x128xf32>
    %33 = arith.truncf %32 : vector<8x128xf32> to vector<8x128xbf16>
    %cst_18 = arith.constant dense<0.000000e+00> : vector<8x128xf32>
    %34 = tpu.matmul %33, %9, %cst_18 {dimension_numbers = #tpu.dot_dimension_numbers<[1], [0], [0], [1], [0, 0, 1, 1], [], []>} : vector<8x128xbf16>, vector<128x128xbf16>, vector<8x128xf32> -> vector<8x128xf32>
    %35 = arith.addf %34, %12 : vector<8x128xf32>
    %cst_19 = arith.constant 0.000000e+00 : f32
    %36 = vector.broadcast %cst_19 : f32 to vector<8x128xf32>
    %37 = arith.maximumf %35, %36 : vector<8x128xf32>
    %38 = arith.truncf %37 : vector<8x128xf32> to vector<8x128xbf16>
    %cst_20 = arith.constant dense<0.000000e+00> : vector<8x128xf32>
    %39 = tpu.matmul %38, %9, %cst_20 {dimension_numbers = #tpu.dot_dimension_numbers<[1], [0], [0], [1], [0, 0, 1, 1], [], []>} : vector<8x128xbf16>, vector<128x128xbf16>, vector<8x128xf32> -> vector<8x128xf32>
    %40 = arith.addf %39, %12 : vector<8x128xf32>
    %cst_21 = arith.constant 0.000000e+00 : f32
    %41 = vector.broadcast %cst_21 : f32 to vector<8x128xf32>
    %42 = arith.maximumf %40, %41 : vector<8x128xf32>
    %43 = arith.truncf %42 : vector<8x128xf32> to vector<8x128xbf16>
    %c0_22 = arith.constant 0 : index
    %c0_23 = arith.constant 0 : index
    %44 = vector.load %arg6[%c0_22, %c0_23] : memref<128x128xbf16, #tpu.memory_space<vmem>>, vector<128x128xbf16>
    %cst_24 = arith.constant dense<0.000000e+00> : vector<8x128xf32>
    %45 = tpu.matmul %43, %44, %cst_24 {dimension_numbers = #tpu.dot_dimension_numbers<[1], [0], [0], [1], [0, 0, 1, 1], [], []>} : vector<8x128xbf16>, vector<128x128xbf16>, vector<8x128xf32> -> vector<8x128xf32>
    %c0_25 = arith.constant 0 : index
    %c0_26 = arith.constant 0 : index
    %46 = vector.load %arg7[%c0_25, %c0_26] : memref<1x128xf32, #tpu.memory_space<vmem>>, vector<1x128xf32>
    %47 = vector.broadcast %46 : vector<1x128xf32> to vector<8x128xf32>
    %48 = arith.addf %45, %47 : vector<8x128xf32>
    %c0_27 = arith.constant 0 : index
    %c0_28 = arith.constant 0 : index
    %49 = vector.load %arg8[%c0_27, %c0_28] : memref<8x128xf32, #tpu.memory_space<vmem>>, vector<8x128xf32>
    tpu.vector_store %arg8[%c0_27, %c0_28], %48 {strides = array<i32>} : memref<8x128xf32, #tpu.memory_space<vmem>>, vector<8x128xf32>,
    return
  }
  func.func @transform_0(%arg0: i32) -> (i32, i32) {
    %c0_i32 = arith.constant 0 : i32
    %c0_i32_0 = arith.constant 0 : i32
    %c0_i32_1 = arith.constant 0 : i32
    return %c0_i32, %c0_i32_0 : i32, i32
  }
  func.func @transform_1(%arg0: i32) -> (i32, i32) {
    %c0_i32 = arith.constant 0 : i32
    %c0_i32_0 = arith.constant 0 : i32
    %c0_i32_1 = arith.constant 0 : i32
    return %c0_i32, %c0_i32_0 : i32, i32
  }
  func.func @transform_2(%arg0: i32) -> (i32, i32) {
    %c0_i32 = arith.constant 0 : i32
    %c0_i32_0 = arith.constant 0 : i32
    %c0_i32_1 = arith.constant 0 : i32
    return %c0_i32, %c0_i32_0 : i32, i32
  }
  func.func @transform_3(%arg0: i32) -> (i32, i32) {
    %c0_i32 = arith.constant 0 : i32
    %c0_i32_0 = arith.constant 0 : i32
    %c0_i32_1 = arith.constant 0 : i32
    return %c0_i32, %c0_i32_0 : i32, i32
  }
  func.func @transform_4(%arg0: i32) -> (i32, i32) {
    %c0_i32 = arith.constant 0 : i32
    %c0_i32_0 = arith.constant 0 : i32
    %c0_i32_1 = arith.constant 0 : i32
    return %c0_i32, %c0_i32_0 : i32, i32
  }
  func.func @transform_5(%arg0: i32) -> (i32, i32) {
    %c0_i32 = arith.constant 0 : i32
    %c0_i32_0 = arith.constant 0 : i32
    %c0_i32_1 = arith.constant 0 : i32
    return %c0_i32, %c0_i32_0 : i32, i32
  }
  func.func @transform_6(%arg0: i32) -> (i32, i32) {
    %c0_i32 = arith.constant 0 : i32
    %c0_i32_0 = arith.constant 0 : i32
    %c0_i32_1 = arith.constant 0 : i32
    return %c0_i32, %c0_i32_0 : i32, i32
  }
  func.func @transform_7(%arg0: i32) -> (i32, i32) {
    %c0_i32 = arith.constant 0 : i32
    %c0_i32_0 = arith.constant 0 : i32
    %c0_i32_1 = arith.constant 0 : i32
    return %c0_i32, %c0_i32_0 : i32, i32
  }
}

</mosaic_0001>

<llo_original>
// kernel: tpu_custom_call.1
$region0: #{tpu_custom_call.1}
  #allocation0 [shape = 'u32[]', space=smem, size = 0x4, offset = 0x4, fixed_abs, tag = 'smem constant byte address 0x4 - core index']
  #allocation1 [shape = 'u32[144,128]{1,0:T(1,128)}', space=vmem, size = 0x12000, scoped, tag = 'internal scratch']
  %s0 = inlined_call_operand.hbm [shape: f32[8,128], index: 0, kind: input, shape index: {}]
  %s1 = inlined_call_operand.hbm [shape: bf16[128,128], index: 1, kind: input, shape index: {}]
  %s2 = inlined_call_operand.vmem [shape: f32[1,128], index: 2, kind: input, shape index: {}]
  %s3 = inlined_call_operand.hbm [shape: bf16[128,128], index: 3, kind: input, shape index: {}]
  %s4 = inlined_call_operand.vmem [shape: f32[1,128], index: 4, kind: input, shape index: {}]
  %s5 = inlined_call_operand.hbm [shape: bf16[128,128], index: 5, kind: input, shape index: {}]
  %s6 = inlined_call_operand.vmem [shape: f32[1,128], index: 6, kind: input, shape index: {}]
  %s7 = inlined_call_operand.hbm [shape: f32[8,128], index: 7, kind: output, shape index: {}]
  %s8 = sld [smem:[#allocation0]]
  $region54: #{tpu_custom_call.1} parent=0
    _
  %s10 = ssub.s32 1, %s8
  %s11 = scalar_select 0, %s10, %s8
  $region1: #{tpu_custom_call.1} parent=0
    #allocation2 [shape = 'u8[4096]{0}', space=vmem, size = 0x1000, scoped, tag = 'input window, operand 0, single buffered']
    #allocation3 [shape = 's32[1]{0}', space=sflag, size = 0x4, scoped, tag = 'scoped memory for tpu_custom_call.1']
    #allocation4 [shape = 's32[1]{0}', space=sflag, size = 0x4, scoped, tag = 'scoped memory for tpu_custom_call.1']
    #allocation5 [shape = 'u8[32768]{0}', space=vmem, size = 0x8000, scoped, tag = 'input window, operand 1, single buffered']
    #allocation6 [shape = 's32[1]{0}', space=sflag, size = 0x4, scoped, tag = 'scoped memory for tpu_custom_call.1']
    #allocation7 [shape = 'u8[32768]{0}', space=vmem, size = 0x8000, scoped, tag = 'input window, operand 3, single buffered']
    #allocation8 [shape = 'u8[32768]{0}', space=vmem, size = 0x8000, scoped, tag = 'input window, operand 5, single buffered']
    #allocation9 [shape = 's32[1]{0}', space=sflag, size = 0x4, scoped, tag = 'scoped memory for tpu_custom_call.1']
    #allocation10 [shape = 'u8[4096]{0}', space=vmem, size = 0x1000, scoped, tag = 'output window, operand 0, single buffered']
    %12 = vsyncpa [#allocation3], 0
    %13 = vsyncpa [#allocation6], 0
    %14 = vsyncpa [#allocation9], 0
    %15 = vsyncpa [#allocation4], 0
    // Predicated region
    $region2: #{tpu_custom_call.1} parent=1 // pred_check
      _
    $region3: #{tpu_custom_call.1} parent=1 // pred_check_branch
      %17 = sbr.rel (0) target = $region5
    $region4: #{tpu_custom_call.1} parent=1 // pred_region
      %s19 = ssub.s32 128, 128
      %20 = vsyncadd [#allocation3], %s19
      %s22 = sshll.u32 [#allocation2], 4
      %s23 = int_to_ptr.vmem [resolvable:$true] %s22
      %25 = dma.hbm_to_vmem [thread:$0]  %s0, 128, %s23, [#allocation3]
    $region5: #{tpu_custom_call.1} parent=1 // pred_fallthru
      _
    // Predicated region
    $region6: #{tpu_custom_call.1} parent=1 // pred_check
      _
    $region7: #{tpu_custom_call.1} parent=1 // pred_check_branch
      %27 = sbr.rel (0) target = $region9
    $region8: #{tpu_custom_call.1} parent=1 // pred_region
      %s29 = ssub.s32 1024, 1024
      %30 = vsyncadd [#allocation6], %s29
      %s31 = sshll.u32 [#allocation5], 4
      %s32 = int_to_ptr.vmem [resolvable:$true] %s31
      %37 = dma.hbm_to_vmem [thread:$0]  %s1, 1024, %s32, [#allocation6], 64, 64, 4
    $region9: #{tpu_custom_call.1} parent=1 // pred_fallthru
      _
    // Predicated region
    $region10: #{tpu_custom_call.1} parent=1 // pred_check
      _
    $region11: #{tpu_custom_call.1} parent=1 // pred_check_branch
      %39 = sbr.rel (0) target = $region13
    $region12: #{tpu_custom_call.1} parent=1 // pred_region
      _
    $region13: #{tpu_custom_call.1} parent=1 // pred_fallthru
      _
    // Predicated region
    $region14: #{tpu_custom_call.1} parent=1 // pred_check
      _
    $region15: #{tpu_custom_call.1} parent=1 // pred_check_branch
      %41 = sbr.rel (0) target = $region17
    $region16: #{tpu_custom_call.1} parent=1 // pred_region
      %s43 = ssub.s32 1024, 1024
      %44 = vsyncadd [#allocation6], %s43
      %s45 = sshll.u32 [#allocation7], 4
      %s46 = int_to_ptr.vmem [resolvable:$true] %s45
      %51 = dma.hbm_to_vmem [thread:$0]  %s3, 1024, %s46, [#allocation6], 64, 64, 4
    $region17: #{tpu_custom_call.1} parent=1 // pred_fallthru
      _
    // Predicated region
    $region18: #{tpu_custom_call.1} parent=1 // pred_check
      _
    $region19: #{tpu_custom_call.1} parent=1 // pred_check_branch
      %53 = sbr.rel (0) target = $region21
    $region20: #{tpu_custom_call.1} parent=1 // pred_region
      _
    $region21: #{tpu_custom_call.1} parent=1 // pred_fallthru
      _
    // Predicated region
    $region22: #{tpu_custom_call.1} parent=1 // pred_check
      _
    $region23: #{tpu_custom_call.1} parent=1 // pred_check_branch
      %55 = sbr.rel (0) target = $region25
    $region24: #{tpu_custom_call.1} parent=1 // pred_region
      %s57 = ssub.s32 1024, 1024
      %58 = vsyncadd [#allocation9], %s57
      %s59 = sshll.u32 [#allocation8], 4
      %s60 = int_to_ptr.vmem [resolvable:$true] %s59
      %65 = dma.hbm_to_vmem [thread:$0]  %s5, 1024, %s60, [#allocation9], 64, 64, 4
    $region25: #{tpu_custom_call.1} parent=1 // pred_fallthru
      _
    // Predicated region
    $region26: #{tpu_custom_call.1} parent=1 // pred_check
      _
    $region27: #{tpu_custom_call.1} parent=1 // pred_check_branch
      %67 = sbr.rel (0) target = $region29
    $region28: #{tpu_custom_call.1} parent=1 // pred_region
      _
    $region29: #{tpu_custom_call.1} parent=1 // pred_fallthru
      _
    // Predicated region
    $region30: #{tpu_custom_call.1} parent=1 // pred_check
      _
    $region31: #{tpu_custom_call.1} parent=1 // pred_check_branch
      %69 = sbr.rel (0) target = $region33
    $region32: #{tpu_custom_call.1} parent=1 // pred_region
      %70 = dma.done [#allocation3], 128
    $region33: #{tpu_custom_call.1} parent=1 // pred_fallthru
      _
    // Predicated region
    $region34: #{tpu_custom_call.1} parent=1 // pred_check
      _
    $region35: #{tpu_custom_call.1} parent=1 // pred_check_branch
      %72 = sbr.rel (0) target = $region37
    $region36: #{tpu_custom_call.1} parent=1 // pred_region
      %73 = dma.done [#allocation6], 1024
    $region37: #{tpu_custom_call.1} parent=1 // pred_fallthru
      _
    // Predicated region
    $region38: #{tpu_custom_call.1} parent=1 // pred_check
      _
    $region39: #{tpu_custom_call.1} parent=1 // pred_check_branch
      %75 = sbr.rel (0) target = $region41
    $region40: #{tpu_custom_call.1} parent=1 // pred_region
      %76 = dma.done [#allocation6], 1024
    $region41: #{tpu_custom_call.1} parent=1 // pred_fallthru
      _
    // Predicated region
    $region42: #{tpu_custom_call.1} parent=1 // pred_check
      _
    $region43: #{tpu_custom_call.1} parent=1 // pred_check_branch
      %78 = sbr.rel (0) target = $region45
    $region44: #{tpu_custom_call.1} parent=1 // pred_region
      %79 = dma.done [#allocation9], 1024
    $region45: #{tpu_custom_call.1} parent=1 // pred_fallthru
      _
    %v81 = vld [vmem:[#allocation2] sm:$0xff]
    %v82 = vpack.c.bf16 %v81, %v81
    %v83 = vld [vmem:[#allocation5] sm:$0xf]
    %v84 = vld [vmem:[#allocation5 + $0x4] sm:$0xf]
    %v85 = vld [vmem:[#allocation5 + $0x8] sm:$0xf]
    %v86 = vld [vmem:[#allocation5 + $0xc] sm:$0xf]
    %v87 = vld [vmem:[#allocation5 + $0x10] sm:$0xf]
    %v88 = vld [vmem:[#allocation5 + $0x14] sm:$0xf]
    %v89 = vld [vmem:[#allocation5 + $0x18] sm:$0xf]
    %v90 = vld [vmem:[#allocation5 + $0x1c] sm:$0xf]
    %v91 = vld [vmem:[#allocation5 + $0x20] sm:$0xf]
    %v92 = vld [vmem:[#allocation5 + $0x24] sm:$0xf]
    %v93 = vld [vmem:[#allocation5 + $0x28] sm:$0xf]
    %v94 = vld [vmem:[#allocation5 + $0x2c] sm:$0xf]
    %v95 = vld [vmem:[#allocation5 + $0x30] sm:$0xf]
    %v96 = vld [vmem:[#allocation5 + $0x34] sm:$0xf]
    %v97 = vld [vmem:[#allocation5 + $0x38] sm:$0xf]
    %v98 = vld [vmem:[#allocation5 + $0x3c] sm:$0xf]
    %v99 = vld [vmem:[%s2] sm:$0x1]
    %v101 = vlaneseq
    %v102 = vshrl.u32 %v101, 7
    %v103 = vsub.s32 0, %v102
    %v104 = vrot.slane %v99, %v103
    %v122 = vunpack.c.l.b16 %v83
    %v123 = vunpack.c.l.b16 %v84
    %v124 = vunpack.c.l.b16 %v85
    %v125 = vunpack.c.l.b16 %v86
    %v126 = vunpack.c.l.b16 %v87
    %v127 = vunpack.c.l.b16 %v88
    %v128 = vunpack.c.l.b16 %v89
    %v129 = vunpack.c.l.b16 %v90
    %v130 = vunpack.c.l.b16 %v91
    %v131 = vunpack.c.l.b16 %v92
    %v132 = vunpack.c.l.b16 %v93
    %v133 = vunpack.c.l.b16 %v94
    %v134 = vunpack.c.l.b16 %v95
    %v135 = vunpack.c.l.b16 %v96
    %v136 = vunpack.c.l.b16 %v97
    %v137 = vunpack.c.l.b16 %v98
    %v138 = vpack.c.b16 %v123, %v122
    %v139 = vpack.c.b16 %v125, %v124
    %v140 = vpack.c.b16 %v127, %v126
    %v141 = vpack.c.b16 %v129, %v128
    %v142 = vpack.c.b16 %v131, %v130
    %v143 = vpack.c.b16 %v133, %v132
    %v144 = vpack.c.b16 %v135, %v134
    %v145 = vpack.c.b16 %v137, %v136
    %154 = vmatprep.subr.bf16.mxu0 0
    %155 = vmatpush1.bf16.msra.mxu0 %v138
    %156 = vmatprep.subr.bf16.mxu0 0
    %157 = vmatpush1.bf16.msra.mxu0 %v139
    %158 = vmatprep.subr.bf16.mxu0 0
    %159 = vmatpush1.bf16.msra.mxu0 %v140
    %160 = vmatprep.subr.bf16.mxu0 0
    %161 = vmatpush1.bf16.msra.mxu0 %v141
    %162 = vmatprep.subr.bf16.mxu0 0
    %163 = vmatpush1.bf16.msra.mxu0 %v142
    %164 = vmatprep.subr.bf16.mxu0 0
    %165 = vmatpush1.bf16.msra.mxu0 %v143
    %166 = vmatprep.subr.bf16.mxu0 0
    %167 = vmatpush1.bf16.msra.mxu0 %v144
    %168 = vmatprep.subr.bf16.mxu0 0
    %169 = vmatpush1.bf16.msra.mxu0 %v145
    %170 = vmatprep.subr.bf16.mxu0 0
    %171 = vmatpush1.bf16.msra.mxu0 0
    %172 = vmatprep.subr.bf16.mxu0 0
    %173 = vmatpush1.bf16.msra.mxu0 0
    %174 = vmatprep.subr.bf16.mxu0 0
    %175 = vmatpush1.bf16.msra.mxu0 0
    %176 = vmatprep.subr.bf16.mxu0 0
    %177 = vmatpush1.bf16.msra.mxu0 0
    %178 = vmatprep.subr.bf16.mxu0 0
    %179 = vmatpush1.bf16.msra.mxu0 0
    %180 = vmatprep.subr.bf16.mxu0 0
    %181 = vmatpush1.bf16.msra.mxu0 0
    %182 = vmatprep.subr.bf16.mxu0 0
    %183 = vmatpush1.bf16.msra.mxu0 0
    %184 = vmatprep.subr.bf16.mxu0 0
    %185 = vmatpush1.bf16.msra.mxu0 0
    %186 = vmatprep.mubr.bf16.mxu0 0
    %187 = vmatmul.mubr.bf16.gmra.mrb[0].mxu0 %v82
    %v188 = vpop.f32.mrb[0].mxu0
    %v189 = vadd.f32 %v104, %v188
    %v190 = vpop.f32.mrb[0].mxu0
    %v191 = vpop.f32.mrb[0].mxu0
    %v192 = vpop.f32.mrb[0].mxu0
    %193 = vdwg.mxu0
    %v194 = vmax.f32 %v189, 0.0
    %v195 = vld [vmem:[#allocation7] sm:$0xf]
    %v196 = vld [vmem:[#allocation7 + $0x4] sm:$0xf]
    %v197 = vld [vmem:[#allocation7 + $0x8] sm:$0xf]
    %v198 = vld [vmem:[#allocation7 + $0xc] sm:$0xf]
    %v199 = vld [vmem:[#allocation7 + $0x10] sm:$0xf]
    %v200 = vld [vmem:[#allocation7 + $0x14] sm:$0xf]
    %v201 = vld [vmem:[#allocation7 + $0x18] sm:$0xf]
    %v202 = vld [vmem:[#allocation7 + $0x1c] sm:$0xf]
    %v203 = vld [vmem:[#allocation7 + $0x20] sm:$0xf]
    %v204 = vld [vmem:[#allocation7 + $0x24] sm:$0xf]
    %v205 = vld [vmem:[#allocation7 + $0x28] sm:$0xf]
    %v206 = vld [vmem:[#allocation7 + $0x2c] sm:$0xf]
    %v207 = vld [vmem:[#allocation7 + $0x30] sm:$0xf]
    %v208 = vld [vmem:[#allocation7 + $0x34] sm:$0xf]
    %v209 = vld [vmem:[#allocation7 + $0x38] sm:$0xf]
    %v210 = vld [vmem:[#allocation7 + $0x3c] sm:$0xf]
    %v211 = vld [vmem:[%s4] sm:$0x1]
    %v213 = vlaneseq
    %v214 = vshrl.u32 %v213, 7
    %v215 = vsub.s32 0, %v214
    %v216 = vrot.slane %v211, %v215
    %v218 = vpack.c.bf16 %v194, %v194
    %v235 = vunpack.c.l.b16 %v195
    %v236 = vunpack.c.l.b16 %v196
    %v237 = vunpack.c.l.b16 %v197
    %v238 = vunpack.c.l.b16 %v198
    %v239 = vunpack.c.l.b16 %v199
    %v240 = vunpack.c.l.b16 %v200
    %v241 = vunpack.c.l.b16 %v201
    %v242 = vunpack.c.l.b16 %v202
    %v243 = vunpack.c.l.b16 %v203
    %v244 = vunpack.c.l.b16 %v204
    %v245 = vunpack.c.l.b16 %v205
    %v246 = vunpack.c.l.b16 %v206
    %v247 = vunpack.c.l.b16 %v207
    %v248 = vunpack.c.l.b16 %v208
    %v249 = vunpack.c.l.b16 %v209
    %v250 = vunpack.c.l.b16 %v210
    %v251 = vpack.c.b16 %v236, %v235
    %v252 = vpack.c.b16 %v238, %v237
    %v253 = vpack.c.b16 %v240, %v239
    %v254 = vpack.c.b16 %v242, %v241
    %v255 = vpack.c.b16 %v244, %v243
    %v256 = vpack.c.b16 %v246, %v245
    %v257 = vpack.c.b16 %v248, %v247
    %v258 = vpack.c.b16 %v250, %v249
    %267 = vmatprep.subr.bf16.mxu0 0
    %268 = vmatpush1.bf16.msra.mxu0 %v251
    %269 = vmatprep.subr.bf16.mxu0 0
    %270 = vmatpush1.bf16.msra.mxu0 %v252
    %271 = vmatprep.subr.bf16.mxu0 0
    %272 = vmatpush1.bf16.msra.mxu0 %v253
    %273 = vmatprep.subr.bf16.mxu0 0
    %274 = vmatpush1.bf16.msra.mxu0 %v254
    %275 = vmatprep.subr.bf16.mxu0 0
    %276 = vmatpush1.bf16.msra.mxu0 %v255
    %277 = vmatprep.subr.bf16.mxu0 0
    %278 = vmatpush1.bf16.msra.mxu0 %v256
    %279 = vmatprep.subr.bf16.mxu0 0
    %280 = vmatpush1.bf16.msra.mxu0 %v257
    %281 = vmatprep.subr.bf16.mxu0 0
    %282 = vmatpush1.bf16.msra.mxu0 %v258
    %283 = vmatprep.subr.bf16.mxu0 0
    %284 = vmatpush1.bf16.msra.mxu0 0
    %285 = vmatprep.subr.bf16.mxu0 0
    %286 = vmatpush1.bf16.msra.mxu0 0
    %287 = vmatprep.subr.bf16.mxu0 0
    %288 = vmatpush1.bf16.msra.mxu0 0
    %289 = vmatprep.subr.bf16.mxu0 0
    %290 = vmatpush1.bf16.msra.mxu0 0
    %291 = vmatprep.subr.bf16.mxu0 0
    %292 = vmatpush1.bf16.msra.mxu0 0
    %293 = vmatprep.subr.bf16.mxu0 0
    %294 = vmatpush1.bf16.msra.mxu0 0
    %295 = vmatprep.subr.bf16.mxu0 0
    %296 = vmatpush1.bf16.msra.mxu0 0
    %297 = vmatprep.subr.bf16.mxu0 0
    %298 = vmatpush1.bf16.msra.mxu0 0
    %299 = vmatprep.mubr.bf16.mxu0 0
    %300 = vmatmul.mubr.bf16.gmra.mrb[0].mxu0 %v218
    %v301 = vpop.f32.mrb[0].mxu0
    %v302 = vadd.f32 %v216, %v301
    %v303 = vpop.f32.mrb[0].mxu0
    %v304 = vpop.f32.mrb[0].mxu0
    %v305 = vpop.f32.mrb[0].mxu0
    %306 = vdwg.mxu0
    %v307 = vmax.f32 %v302, 0.0
    %v308 = vpack.c.bf16 %v307, %v307
    %309 = vmatprep.subr.bf16.mxu0 0
    %310 = vmatpush1.bf16.msra.mxu0 %v251
    %311 = vmatprep.subr.bf16.mxu0 0
    %312 = vmatpush1.bf16.msra.mxu0 %v252
    %313 = vmatprep.subr.bf16.mxu0 0
    %314 = vmatpush1.bf16.msra.mxu0 %v253
    %315 = vmatprep.subr.bf16.mxu0 0
    %316 = vmatpush1.bf16.msra.mxu0 %v254
    %317 = vmatprep.subr.bf16.mxu0 0
    %318 = vmatpush1.bf16.msra.mxu0 %v255
    %319 = vmatprep.subr.bf16.mxu0 0
    %320 = vmatpush1.bf16.msra.mxu0 %v256
    %321 = vmatprep.subr.bf16.mxu0 0
    %322 = vmatpush1.bf16.msra.mxu0 %v257
    %323 = vmatprep.subr.bf16.mxu0 0
    %324 = vmatpush1.bf16.msra.mxu0 %v258
    %325 = vmatprep.subr.bf16.mxu0 0
    %326 = vmatpush1.bf16.msra.mxu0 0
    %327 = vmatprep.subr.bf16.mxu0 0
    %328 = vmatpush1.bf16.msra.mxu0 0
    %329 = vmatprep.subr.bf16.mxu0 0
    %330 = vmatpush1.bf16.msra.mxu0 0
    %331 = vmatprep.subr.bf16.mxu0 0
    %332 = vmatpush1.bf16.msra.mxu0 0
    %333 = vmatprep.subr.bf16.mxu0 0
    %334 = vmatpush1.bf16.msra.mxu0 0
    %335 = vmatprep.subr.bf16.mxu0 0
    %336 = vmatpush1.bf16.msra.mxu0 0
    %337 = vmatprep.subr.bf16.mxu0 0
    %338 = vmatpush1.bf16.msra.mxu0 0
    %339 = vmatprep.subr.bf16.mxu0 0
    %340 = vmatpush1.bf16.msra.mxu0 0
    %341 = vmatprep.mubr.bf16.mxu0 0
    %342 = vmatmul.mubr.bf16.gmra.mrb[0].mxu0 %v308
    %v343 = vpop.f32.mrb[0].mxu0
    %v344 = vadd.f32 %v216, %v343
    %v345 = vpop.f32.mrb[0].mxu0
    %v346 = vpop.f32.mrb[0].mxu0
    %v347 = vpop.f32.mrb[0].mxu0
    %348 = vdwg.mxu0
    %v349 = vmax.f32 %v344, 0.0
    %v350 = vpack.c.bf16 %v349, %v349
    %351 = vmatprep.subr.bf16.mxu0 0
    %352 = vmatpush1.bf16.msra.mxu0 %v251
    %353 = vmatprep.subr.bf16.mxu0 0
    %354 = vmatpush1.bf16.msra.mxu0 %v252
    %355 = vmatprep.subr.bf16.mxu0 0
    %356 = vmatpush1.bf16.msra.mxu0 %v253
    %357 = vmatprep.subr.bf16.mxu0 0
    %358 = vmatpush1.bf16.msra.mxu0 %v254
    %359 = vmatprep.subr.bf16.mxu0 0
    %360 = vmatpush1.bf16.msra.mxu0 %v255
    %361 = vmatprep.subr.bf16.mxu0 0
    %362 = vmatpush1.bf16.msra.mxu0 %v256
    %363 = vmatprep.subr.bf16.mxu0 0
    %364 = vmatpush1.bf16.msra.mxu0 %v257
    %365 = vmatprep.subr.bf16.mxu0 0
    %366 = vmatpush1.bf16.msra.mxu0 %v258
    %367 = vmatprep.subr.bf16.mxu0 0
    %368 = vmatpush1.bf16.msra.mxu0 0
    %369 = vmatprep.subr.bf16.mxu0 0
    %370 = vmatpush1.bf16.msra.mxu0 0
    %371 = vmatprep.subr.bf16.mxu0 0
    %372 = vmatpush1.bf16.msra.mxu0 0
    %373 = vmatprep.subr.bf16.mxu0 0
    %374 = vmatpush1.bf16.msra.mxu0 0
    %375 = vmatprep.subr.bf16.mxu0 0
    %376 = vmatpush1.bf16.msra.mxu0 0
    %377 = vmatprep.subr.bf16.mxu0 0
    %378 = vmatpush1.bf16.msra.mxu0 0
    %379 = vmatprep.subr.bf16.mxu0 0
    %380 = vmatpush1.bf16.msra.mxu0 0
    %381 = vmatprep.subr.bf16.mxu0 0
    %382 = vmatpush1.bf16.msra.mxu0 0
    %383 = vmatprep.mubr.bf16.mxu0 0
    %384 = vmatmul.mubr.bf16.gmra.mrb[0].mxu0 %v350
    %v385 = vpop.f32.mrb[0].mxu0
    %v386 = vadd.f32 %v216, %v385
    %v387 = vpop.f32.mrb[0].mxu0
    %v388 = vpop.f32.mrb[0].mxu0
    %v389 = vpop.f32.mrb[0].mxu0
    %390 = vdwg.mxu0
    %v391 = vmax.f32 %v386, 0.0
    %v392 = vpack.c.bf16 %v391, %v391
    %393 = vmatprep.subr.bf16.mxu0 0
    %394 = vmatpush1.bf16.msra.mxu0 %v251
    %395 = vmatprep.subr.bf16.mxu0 0
    %396 = vmatpush1.bf16.msra.mxu0 %v252
    %397 = vmatprep.subr.bf16.mxu0 0
    %398 = vmatpush1.bf16.msra.mxu0 %v253
    %399 = vmatprep.subr.bf16.mxu0 0
    %400 = vmatpush1.bf16.msra.mxu0 %v254
    %401 = vmatprep.subr.bf16.mxu0 0
    %402 = vmatpush1.bf16.msra.mxu0 %v255
    %403 = vmatprep.subr.bf16.mxu0 0
    %404 = vmatpush1.bf16.msra.mxu0 %v256
    %405 = vmatprep.subr.bf16.mxu0 0
    %406 = vmatpush1.bf16.msra.mxu0 %v257
    %407 = vmatprep.subr.bf16.mxu0 0
    %408 = vmatpush1.bf16.msra.mxu0 %v258
    %409 = vmatprep.subr.bf16.mxu0 0
    %410 = vmatpush1.bf16.msra.mxu0 0
    %411 = vmatprep.subr.bf16.mxu0 0
    %412 = vmatpush1.bf16.msra.mxu0 0
    %413 = vmatprep.subr.bf16.mxu0 0
    %414 = vmatpush1.bf16.msra.mxu0 0
    %415 = vmatprep.subr.bf16.mxu0 0
    %416 = vmatpush1.bf16.msra.mxu0 0
    %417 = vmatprep.subr.bf16.mxu0 0
    %418 = vmatpush1.bf16.msra.mxu0 0
    %419 = vmatprep.subr.bf16.mxu0 0
    %420 = vmatpush1.bf16.msra.mxu0 0
    %421 = vmatprep.subr.bf16.mxu0 0
    %422 = vmatpush1.bf16.msra.mxu0 0
    %423 = vmatprep.subr.bf16.mxu0 0
    %424 = vmatpush1.bf16.msra.mxu0 0
    %425 = vmatprep.mubr.bf16.mxu0 0
    %426 = vmatmul.mubr.bf16.gmra.mrb[0].mxu0 %v392
    %v427 = vpop.f32.mrb[0].mxu0
    %v428 = vadd.f32 %v216, %v427
    %v429 = vpop.f32.mrb[0].mxu0
    %v430 = vpop.f32.mrb[0].mxu0
    %v431 = vpop.f32.mrb[0].mxu0
    %432 = vdwg.mxu0
    %v433 = vmax.f32 %v428, 0.0
    %v434 = vpack.c.bf16 %v433, %v433
    %435 = vmatprep.subr.bf16.mxu0 0
    %436 = vmatpush1.bf16.msra.mxu0 %v251
    %437 = vmatprep.subr.bf16.mxu0 0
    %438 = vmatpush1.bf16.msra.mxu0 %v252
    %439 = vmatprep.subr.bf16.mxu0 0
    %440 = vmatpush1.bf16.msra.mxu0 %v253
    %441 = vmatprep.subr.bf16.mxu0 0
    %442 = vmatpush1.bf16.msra.mxu0 %v254
    %443 = vmatprep.subr.bf16.mxu0 0
    %444 = vmatpush1.bf16.msra.mxu0 %v255
    %445 = vmatprep.subr.bf16.mxu0 0
    %446 = vmatpush1.bf16.msra.mxu0 %v256
    %447 = vmatprep.subr.bf16.mxu0 0
    %448 = vmatpush1.bf16.msra.mxu0 %v257
    %449 = vmatprep.subr.bf16.mxu0 0
    %450 = vmatpush1.bf16.msra.mxu0 %v258
    %451 = vmatprep.subr.bf16.mxu0 0
    %452 = vmatpush1.bf16.msra.mxu0 0
    %453 = vmatprep.subr.bf16.mxu0 0
    %454 = vmatpush1.bf16.msra.mxu0 0
    %455 = vmatprep.subr.bf16.mxu0 0
    %456 = vmatpush1.bf16.msra.mxu0 0
    %457 = vmatprep.subr.bf16.mxu0 0
    %458 = vmatpush1.bf16.msra.mxu0 0
    %459 = vmatprep.subr.bf16.mxu0 0
    %460 = vmatpush1.bf16.msra.mxu0 0
    %461 = vmatprep.subr.bf16.mxu0 0
    %462 = vmatpush1.bf16.msra.mxu0 0
    %463 = vmatprep.subr.bf16.mxu0 0
    %464 = vmatpush1.bf16.msra.mxu0 0
    %465 = vmatprep.subr.bf16.mxu0 0
    %466 = vmatpush1.bf16.msra.mxu0 0
    %467 = vmatprep.mubr.bf16.mxu0 0
    %468 = vmatmul.mubr.bf16.gmra.mrb[0].mxu0 %v434
    %v469 = vpop.f32.mrb[0].mxu0
    %v470 = vadd.f32 %v216, %v469
    %v471 = vpop.f32.mrb[0].mxu0
    %v472 = vpop.f32.mrb[0].mxu0
    %v473 = vpop.f32.mrb[0].mxu0
    %474 = vdwg.mxu0
    %v475 = vmax.f32 %v470, 0.0
    %v476 = vpack.c.bf16 %v475, %v475
    %477 = vmatprep.subr.bf16.mxu0 0
    %478 = vmatpush1.bf16.msra.mxu0 %v251
    %479 = vmatprep.subr.bf16.mxu0 0
    %480 = vmatpush1.bf16.msra.mxu0 %v252
    %481 = vmatprep.subr.bf16.mxu0 0
    %482 = vmatpush1.bf16.msra.mxu0 %v253
    %483 = vmatprep.subr.bf16.mxu0 0
    %484 = vmatpush1.bf16.msra.mxu0 %v254
    %485 = vmatprep.subr.bf16.mxu0 0
    %486 = vmatpush1.bf16.msra.mxu0 %v255
    %487 = vmatprep.subr.bf16.mxu0 0
    %488 = vmatpush1.bf16.msra.mxu0 %v256
    %489 = vmatprep.subr.bf16.mxu0 0
    %490 = vmatpush1.bf16.msra.mxu0 %v257
    %491 = vmatprep.subr.bf16.mxu0 0
    %492 = vmatpush1.bf16.msra.mxu0 %v258
    %493 = vmatprep.subr.bf16.mxu0 0
    %494 = vmatpush1.bf16.msra.mxu0 0
    %495 = vmatprep.subr.bf16.mxu0 0
    %496 = vmatpush1.bf16.msra.mxu0 0
    %497 = vmatprep.subr.bf16.mxu0 0
    %498 = vmatpush1.bf16.msra.mxu0 0
    %499 = vmatprep.subr.bf16.mxu0 0
    %500 = vmatpush1.bf16.msra.mxu0 0
    %501 = vmatprep.subr.bf16.mxu0 0
    %502 = vmatpush1.bf16.msra.mxu0 0
    %503 = vmatprep.subr.bf16.mxu0 0
    %504 = vmatpush1.bf16.msra.mxu0 0
    %505 = vmatprep.subr.bf16.mxu0 0
    %506 = vmatpush1.bf16.msra.mxu0 0
    %507 = vmatprep.subr.bf16.mxu0 0
    %508 = vmatpush1.bf16.msra.mxu0 0
    %509 = vmatprep.mubr.bf16.mxu0 0
    %510 = vmatmul.mubr.bf16.gmra.mrb[0].mxu0 %v476
    %v511 = vpop.f32.mrb[0].mxu0
    %v512 = vadd.f32 %v216, %v511
    %v513 = vpop.f32.mrb[0].mxu0
    %v514 = vpop.f32.mrb[0].mxu0
    %v515 = vpop.f32.mrb[0].mxu0
    %516 = vdwg.mxu0
    %v517 = vmax.f32 %v512, 0.0
    %v518 = vpack.c.bf16 %v517, %v517
    %v519 = vld [vmem:[#allocation8] sm:$0xf]
    %v520 = vld [vmem:[#allocation8 + $0x4] sm:$0xf]
    %v521 = vld [vmem:[#allocation8 + $0x8] sm:$0xf]
    %v522 = vld [vmem:[#allocation8 + $0xc] sm:$0xf]
    %v523 = vld [vmem:[#allocation8 + $0x10] sm:$0xf]
    %v524 = vld [vmem:[#allocation8 + $0x14] sm:$0xf]
    %v525 = vld [vmem:[#allocation8 + $0x18] sm:$0xf]
    %v526 = vld [vmem:[#allocation8 + $0x1c] sm:$0xf]
    %v527 = vld [vmem:[#allocation8 + $0x20] sm:$0xf]
    %v528 = vld [vmem:[#allocation8 + $0x24] sm:$0xf]
    %v529 = vld [vmem:[#allocation8 + $0x28] sm:$0xf]
    %v530 = vld [vmem:[#allocation8 + $0x2c] sm:$0xf]
    %v531 = vld [vmem:[#allocation8 + $0x30] sm:$0xf]
    %v532 = vld [vmem:[#allocation8 + $0x34] sm:$0xf]
    %v533 = vld [vmem:[#allocation8 + $0x38] sm:$0xf]
    %v534 = vld [vmem:[#allocation8 + $0x3c] sm:$0xf]
    %v535 = vld [vmem:[%s6] sm:$0x1]
    %v537 = vlaneseq
    %v538 = vshrl.u32 %v537, 7
    %v539 = vsub.s32 0, %v538
    %v540 = vrot.slane %v535, %v539
    %v558 = vunpack.c.l.b16 %v519
    %v559 = vunpack.c.l.b16 %v520
    %v560 = vunpack.c.l.b16 %v521
    %v561 = vunpack.c.l.b16 %v522
    %v562 = vunpack.c.l.b16 %v523
    %v563 = vunpack.c.l.b16 %v524
    %v564 = vunpack.c.l.b16 %v525
    %v565 = vunpack.c.l.b16 %v526
    %v566 = vunpack.c.l.b16 %v527
    %v567 = vunpack.c.l.b16 %v528
    %v568 = vunpack.c.l.b16 %v529
    %v569 = vunpack.c.l.b16 %v530
    %v570 = vunpack.c.l.b16 %v531
    %v571 = vunpack.c.l.b16 %v532
    %v572 = vunpack.c.l.b16 %v533
    %v573 = vunpack.c.l.b16 %v534
    %v574 = vpack.c.b16 %v559, %v558
    %v575 = vpack.c.b16 %v561, %v560
    %v576 = vpack.c.b16 %v563, %v562
    %v577 = vpack.c.b16 %v565, %v564
    %v578 = vpack.c.b16 %v567, %v566
    %v579 = vpack.c.b16 %v569, %v568
    %v580 = vpack.c.b16 %v571, %v570
    %v581 = vpack.c.b16 %v573, %v572
    %590 = vmatprep.subr.bf16.mxu0 0
    %591 = vmatpush1.bf16.msra.mxu0 %v574
    %592 = vmatprep.subr.bf16.mxu0 0
    %593 = vmatpush1.bf16.msra.mxu0 %v575
    %594 = vmatprep.subr.bf16.mxu0 0
    %595 = vmatpush1.bf16.msra.mxu0 %v576
    %596 = vmatprep.subr.bf16.mxu0 0
    %597 = vmatpush1.bf16.msra.mxu0 %v577
    %598 = vmatprep.subr.bf16.mxu0 0
    %599 = vmatpush1.bf16.msra.mxu0 %v578
    %600 = vmatprep.subr.bf16.mxu0 0
    %601 = vmatpush1.bf16.msra.mxu0 %v579
    %602 = vmatprep.subr.bf16.mxu0 0
    %603 = vmatpush1.bf16.msra.mxu0 %v580
    %604 = vmatprep.subr.bf16.mxu0 0
    %605 = vmatpush1.bf16.msra.mxu0 %v581
    %606 = vmatprep.subr.bf16.mxu0 0
    %607 = vmatpush1.bf16.msra.mxu0 0
    %608 = vmatprep.subr.bf16.mxu0 0
    %609 = vmatpush1.bf16.msra.mxu0 0
    %610 = vmatprep.subr.bf16.mxu0 0
    %611 = vmatpush1.bf16.msra.mxu0 0
    %612 = vmatprep.subr.bf16.mxu0 0
    %613 = vmatpush1.bf16.msra.mxu0 0
    %614 = vmatprep.subr.bf16.mxu0 0
    %615 = vmatpush1.bf16.msra.mxu0 0
    %616 = vmatprep.subr.bf16.mxu0 0
    %617 = vmatpush1.bf16.msra.mxu0 0
    %618 = vmatprep.subr.bf16.mxu0 0
    %619 = vmatpush1.bf16.msra.mxu0 0
    %620 = vmatprep.subr.bf16.mxu0 0
    %621 = vmatpush1.bf16.msra.mxu0 0
    %622 = vmatprep.mubr.bf16.mxu0 0
    %623 = vmatmul.mubr.bf16.gmra.mrb[0].mxu0 %v518
    %v624 = vpop.f32.mrb[0].mxu0
    %v625 = vadd.f32 %v540, %v624
    %v626 = vpop.f32.mrb[0].mxu0
    %v627 = vpop.f32.mrb[0].mxu0
    %v628 = vpop.f32.mrb[0].mxu0
    %629 = vdwg.mxu0
    %630 = vst [vmem:[#allocation10] sm:$0xff] %v625
    // Predicated region
    $region46: #{tpu_custom_call.1} parent=1 // pred_check
      _
    $region47: #{tpu_custom_call.1} parent=1 // pred_check_branch
      %632 = sbr.rel (0) target = $region49
    $region48: #{tpu_custom_call.1} parent=1 // pred_region
      %s634 = ssub.s32 128, 128
      %635 = vsyncadd [#allocation4], %s634
      %s637 = sshll.u32 [#allocation10], 4
      %s638 = int_to_ptr.vmem [resolvable:$true] %s637
      %640 = dma.vmem_to_hbm [thread:$0]  %s638, 128, %s7, [#allocation4]
    $region49: #{tpu_custom_call.1} parent=1 // pred_fallthru
      _
    // Predicated region
    $region50: #{tpu_custom_call.1} parent=1 // pred_check
      _
    $region51: #{tpu_custom_call.1} parent=1 // pred_check_branch
      %642 = sbr.rel (0) target = $region53
    $region52: #{tpu_custom_call.1} parent=1 // pred_region
      %643 = dma.done [#allocation4], 128
    $region53: #{tpu_custom_call.1} parent=1 // pred_fallthru
      _
    %644 = vsyncpa [#allocation3], 1
    %645 = vsyncpa [#allocation6], 1
    %646 = vsyncpa [#allocation9], 1
    %647 = vsyncpa [#allocation4], 1

</llo_original>
